<compile_context>
chip_gen: v6e
topology: v6e:2x2x1
jax: 0.10.0
libtpu: 0.0.40
codegen_flags: <defaults>
</compile_context>

<pallas_src>
import functools

import jax
import jax.numpy as jnp
from jax.experimental import pallas as pl
from jax.experimental.pallas import tpu as pltpu

LANES = 128
TILE_BYTES = 2 * 1024 * 1024   # target per-input, per-buffer tile size (~2 MiB)
NUM_SUMS = 4                   # focal, p*t, p, t
ACC_SUBLANES = 8               # accumulator kept as full (8, 128) vreg tiles


def _round_up(v, m):
    return ((v + m - 1) // m) * m


def _sublane_tile(dtype):
    # Sub-32-bit dtypes pack along sublanes: f32 -> 8, bf16 -> 16, int8/fp8 -> 32.
    return max(8, 32 // jnp.dtype(dtype).itemsize)


def _num_tensorcores():
    # v5e/v6e expose one TensorCore per device; v7x exposes two.
    try:
        kind = jax.devices()[0].device_kind.lower()
    except Exception:
        return 1
    return 2 if "v7" in kind else 1


def _mixed_loss_kernel(x_ref, t_ref, out_ref, acc_ref, *,
                       gamma, gamma_int, rows, tm, nblk):
    c = pl.program_id(0)   # core-split ("parallel") axis
    i = pl.program_id(1)   # reduction ("arbitrary") axis

    @pl.when(i == 0)
    def _():
        acc_ref[...] = jnp.zeros_like(acc_ref)

    x = x_ref[...].astype(jnp.float32)
    t = t_ref[...].astype(jnp.float32)

    g = c * nblk + i            # global (unclamped) row-block index
    row_start = g * tm
    row_end = row_start + tm
    nv = tm // 8

    def accumulate(xb, tb, mask):
        # Mask FIRST so Pallas-padded garbage never reaches the transcendentals.
        if mask is not None:
            xb = jnp.where(mask, xb, 0.0)
            tb = jnp.where(mask, tb, 0.0)
        # ~3 EUP transcendentals per element total:
        s_pos = jax.nn.log_sigmoid(xb)          # log sigmoid(x)   (~2 EUP: exp + log1p)
        bce = xb - xb * tb - s_pos              # exact stable BCE-with-logits rewrite
        p = jnp.exp(s_pos)                      # sigmoid(x)       (1 EUP)
        if gamma_int is not None:
            # exp(gamma * invprobs) == (t ? 1-p : p) ** gamma  -- exact for binary t.
            mod = jnp.where(tb > 0.5, 1.0 - p, p)
            if gamma_int == 0:
                w = jnp.ones_like(mod)
            else:
                w = mod
                for _ in range(gamma_int - 1):  # repeated VPU multiply, zero EUP
                    w = w * mod
        else:
            s_neg = s_pos - xb                  # log_sigmoid(-x) identity, zero EUP
            w = jnp.exp(gamma * jnp.where(tb > 0.5, s_neg, s_pos))
        focal = w * bce
        if mask is not None:
            mf = mask.astype(jnp.float32)
            focal = focal * mf
            p = p * mf                          # tb already zeroed above
        # Full-vreg accumulation: (tm,128) -> (tm//8, 8, 128); axis-0 sum is pure
        # VPU vreg adds (no XLU), single (8,128) store per quantity.
        acc_ref[0] += jnp.sum(focal.reshape(nv, 8, LANES), axis=0)
        acc_ref[1] += jnp.sum((p * tb).reshape(nv, 8, LANES), axis=0)
        acc_ref[2] += jnp.sum(p.reshape(nv, 8, LANES), axis=0)
        acc_ref[3] += jnp.sum(tb.reshape(nv, 8, LANES), axis=0)

    # Fast path: block entirely inside the valid row range.
    @pl.when(row_end <= rows)
    def _():
        accumulate(x, t, None)

    # Ragged boundary block: row-level validity mask from an iota.
    # (Blocks with row_start >= rows are fully out of range -> skipped.)
    @pl.when(jnp.logical_and(row_start < rows, row_end > rows))
    def _():
        row = jax.lax.broadcasted_iota(jnp.int32, (tm, LANES), 0)
        accumulate(x, t, (row_start + row) < rows)

    # Single full-tile store of the accumulator at the end of the reduction.
    @pl.when(i == nblk - 1)
    def _():
        out_ref[...] = acc_ref[...]


def mixed_loss(logits, target, alpha=10.0, gamma=2.0):
    """MixedLoss.forward(input, target) -> scalar loss (binary targets assumed)."""
    assert logits.shape == target.shape, "Target size must match input size"
    n = logits.size
    gamma = float(gamma)
    gamma_int = int(gamma) if (gamma.is_integer() and gamma >= 0) else None

    x_flat = logits.reshape(-1)
    t_flat = target.reshape(-1)

    rows = n // LANES
    n_main = rows * LANES
    rem = n - n_main

    zero = jnp.zeros((), jnp.float32)
    focal_sum = inter = p_sum = t_sum = zero

    if rows > 0:
        if rem:
            # TODO(synk): feed the ragged tail via a pl.BoundedSlice last block
            # instead; this prefix slice may still materialize a near-full copy.
            x_main = x_flat[:n_main]
            t_main = t_flat[:n_main]
        else:
            x_main = x_flat
            t_main = t_flat
        x2 = x_main.reshape(rows, LANES)
        t2 = t_main.reshape(rows, LANES)

        tile = max(_sublane_tile(x2.dtype), _sublane_tile(t2.dtype))
        max_item = max(x2.dtype.itemsize, t2.dtype.itemsize)
        tm_cap = max(tile, TILE_BYTES // (LANES * max_item))   # 4096 rows @ f32
        tm = min(tm_cap, _round_up(rows, tile))

        nblocks = pl.cdiv(rows, tm)                 # total row-blocks
        ncores = min(_num_tensorcores(), nblocks)   # 1 on v5e/v6e, up to 2 on v7x
        nblk = pl.cdiv(nblocks, ncores)             # inner ("arbitrary") grid length
        last_block = nblocks - 1

        def in_map(c, i):
            g = c * nblk + i
            # Clamp so the DMA never indexes past the array; compute for clamped
            # (out-of-range) steps is skipped in-kernel via row_start >= rows.
            return (jnp.minimum(g, last_block), 0)

        kernel = functools.partial(
            _mixed_loss_kernel, gamma=gamma, gamma_int=gamma_int,
            rows=rows, tm=tm, nblk=nblk)

        out_bytes = ncores * NUM_SUMS * ACC_SUBLANES * LANES * 4
        cost = pl.CostEstimate(
            flops=15 * n_main,
            transcendentals=3 * n_main,
            bytes_accessed=n_main * (x2.dtype.itemsize + t2.dtype.itemsize) + out_bytes)

        partials = pl.pallas_call(
            kernel,
            out_shape=jax.ShapeDtypeStruct(
                (ncores * NUM_SUMS, ACC_SUBLANES, LANES), jnp.float32),
            grid_spec=pltpu.PrefetchScalarGridSpec(
                num_scalar_prefetch=0,
                grid=(ncores, nblk),
                in_specs=[
                    pl.BlockSpec((tm, LANES), in_map),
                    pl.BlockSpec((tm, LANES), in_map),
                ],
                out_specs=pl.BlockSpec(
                    (NUM_SUMS, ACC_SUBLANES, LANES), lambda c, i: (c, 0, 0)),
                scratch_shapes=[
                    pltpu.VMEM((NUM_SUMS, ACC_SUBLANES, LANES), jnp.float32)],
            ),
            # TODO(synk): on v7x, switch the leading axis to pltpu.CORE_PARALLEL if
            # an xprof trace shows one TensorCore idle under plain "parallel".
            compiler_params=pltpu.CompilerParams(
                dimension_semantics=("parallel", "arbitrary"),
                vmem_limit_bytes=32 * 1024 * 1024,
            ),
            cost_estimate=cost,
        )(x2, t2)

        sums = jnp.sum(
            partials.reshape(ncores, NUM_SUMS, ACC_SUBLANES, LANES), axis=(0, 2, 3))
        focal_sum, inter, p_sum, t_sum = sums[0], sums[1], sums[2], sums[3]

    if rem:
        # <128-element ragged tail: tiny plain-JAX reduction (reference formulation,
        # exact for soft targets too) -- avoids any full-array pad copy.
        x_t = x_flat[n_main:].astype(jnp.float32)
        t_t = t_flat[n_main:].astype(jnp.float32)
        s_pos_t = jax.nn.log_sigmoid(x_t)
        bce_t = x_t - x_t * t_t - s_pos_t
        invprobs_t = jax.nn.log_sigmoid(-x_t * (t_t * 2.0 - 1.0))
        focal_sum = focal_sum + jnp.sum(jnp.exp(gamma * invprobs_t) * bce_t)
        p_t = jax.nn.sigmoid(x_t)
        inter = inter + jnp.sum(p_t * t_t)
        p_sum = p_sum + jnp.sum(p_t)
        t_sum = t_sum + jnp.sum(t_t)

    focal_mean = focal_sum / n
    smooth = 1.0
    dice = (2.0 * inter + smooth) / (p_sum + t_sum + smooth)
    loss = alpha * focal_mean - jnp.log(dice)
    return loss  # .mean() of a scalar is the scalar itself


def _reference(logits, target, alpha=10.0, gamma=2.0):
    # Direct transcription of the PyTorch module (original formulation).
    x = logits.astype(jnp.float32)
    t = target.astype(jnp.float32)
    max_val = jnp.maximum(-x, 0.0)
    bce = x - x * t + max_val + jnp.log(jnp.exp(-max_val) + jnp.exp(-x - max_val))
    invprobs = jax.nn.log_sigmoid(-x * (t * 2.0 - 1.0))
    focal = jnp.mean(jnp.exp(invprobs * gamma) * bce)
    p = jax.nn.sigmoid(x).reshape(-1)
    tf = t.reshape(-1)
    dice = (2.0 * jnp.sum(p * tf) + 1.0) / (jnp.sum(p) + jnp.sum(tf) + 1.0)
    return alpha * focal - jnp.log(dice)


if __name__ == "__main__":
    key = jax.random.PRNGKey(0)
    k1, k2 = jax.random.split(key)
    # Small segmentation-like shapes: batch=2, channels=4, spatial=16x16.
    logits = jax.random.normal(k1, (2, 4, 16, 16), dtype=jnp.float32)
    target = (jax.random.uniform(k2, (2, 4, 16, 16)) > 0.5).astype(jnp.float32)

    out = mixed_loss(logits, target)
    out = jax.block_until_ready(out)

    ref = _reference(logits, target)
    assert jnp.allclose(out, ref, rtol=1e-5, atol=1e-5), (out, ref)
    print("KERNEL_OK")
</pallas_src>

<mosaic_0001>
module attributes {stable_mosaic.version = 11 : i64} {
  func.func @_mixed_loss_kernel(%arg0: i32, %arg1: i32, %arg2: memref<16x128xf32, #tpu.memory_space<vmem>>, %arg3: memref<16x128xf32, #tpu.memory_space<vmem>>, %arg4: memref<4x8x128xf32, #tpu.memory_space<vmem>>, %arg5: memref<4x8x128xf32, #tpu.memory_space<vmem>>) attributes {dimension_semantics = [#tpu.dimension_semantics<parallel>, #tpu.dimension_semantics<arbitrary>], iteration_bounds = array<i64: 1, 1>, scalar_prefetch = 0 : i64, scratch_operands = 1 : i64, tpu.core_type = #tpu.core_type<tc>, window_params = [{transform_indices = @transform_0, window_bounds = array<i64: 16, 128>}, {transform_indices = @transform_1, window_bounds = array<i64: 16, 128>}, {transform_indices = @transform_2, window_bounds = array<i64: 4, 8, 128>}]} {
    %c0_i32 = arith.constant 0 : i32
    %0 = arith.cmpi eq, %arg1, %c0_i32 : i32
    %1 = arith.extui %0 : i1 to i32
    %c0_i32_0 = arith.constant 0 : i32
    %2 = arith.cmpi ne, %1, %c0_i32_0 : i32
    scf.if %2 {
      %cst = arith.constant 0.000000e+00 : f32
      %20 = vector.broadcast %cst : f32 to vector<4x8x128xf32>
      %c0_12 = arith.constant 0 : index
      %c0_13 = arith.constant 0 : index
      %c0_14 = arith.constant 0 : index
      %21 = vector.load %arg5[%c0_12, %c0_13, %c0_14] : memref<4x8x128xf32, #tpu.memory_space<vmem>>, vector<4x8x128xf32>
      tpu.vector_store %arg5[%c0_12, %c0_13, %c0_14], %20 {strides = array<i32>} : memref<4x8x128xf32, #tpu.memory_space<vmem>>, vector<4x8x128xf32>,
    } else {
    }
    %c0 = arith.constant 0 : index
    %c0_1 = arith.constant 0 : index
    %3 = vector.load %arg2[%c0, %c0_1] : memref<16x128xf32, #tpu.memory_space<vmem>>, vector<16x128xf32>
    %c0_2 = arith.constant 0 : index
    %c0_3 = arith.constant 0 : index
    %4 = vector.load %arg3[%c0_2, %c0_3] : memref<16x128xf32, #tpu.memory_space<vmem>>, vector<16x128xf32>
    %c1_i32 = arith.constant 1 : i32
    %5 = arith.muli %arg0, %c1_i32 : i32
    %6 = arith.addi %5, %arg1 : i32
    %c16_i32 = arith.constant 16 : i32
    %7 = arith.muli %6, %c16_i32 : i32
    %c16_i32_4 = arith.constant 16 : i32
    %8 = arith.addi %7, %c16_i32_4 : i32
    %c16_i32_5 = arith.constant 16 : i32
    %9 = arith.cmpi sle, %8, %c16_i32_5 : i32
    %10 = arith.extui %9 : i1 to i32
    %c0_i32_6 = arith.constant 0 : i32
    %11 = arith.cmpi ne, %10, %c0_i32_6 : i32
    scf.if %11 {
      %cst = arith.constant 0.000000e+00 : f32
      %20 = vector.broadcast %cst : f32 to vector<16x128xf32>
      %21 = arith.subf %20, %3 : vector<16x128xf32>
      %cst_12 = arith.constant 0.000000e+00 : f32
      %22 = vector.broadcast %cst_12 : f32 to vector<16x128xf32>
      %23 = arith.maximumf %21, %22 : vector<16x128xf32>
      %24 = vector.broadcast %cst_12 : f32 to vector<16x128xf32>
      %25 = arith.subf %21, %24 : vector<16x128xf32>
      %26 = arith.cmpf one, %25, %25 : vector<16x128xf32>
      %27 = vector.broadcast %cst_12 : f32 to vector<16x128xf32>
      %28 = arith.addf %21, %27 : vector<16x128xf32>
      %29 = math.absf %25 : vector<16x128xf32>
      %cst_13 = arith.constant 0.000000e+00 : f32
      %30 = vector.broadcast %cst_13 : f32 to vector<16x128xf32>
      %31 = arith.subf %30, %29 : vector<16x128xf32>
      %32 = math.exp %31 : vector<16x128xf32>
      %33 = math.log1p %32 : vector<16x128xf32>
      %34 = arith.addf %23, %33 : vector<16x128xf32>
      %35 = arith.select %26, %28, %34 : vector<16x128xi1>, vector<16x128xf32>
      %cst_14 = arith.constant 0.000000e+00 : f32
      %36 = vector.broadcast %cst_14 : f32 to vector<16x128xf32>
      %37 = arith.subf %36, %35 : vector<16x128xf32>
      %38 = arith.mulf %3, %4 : vector<16x128xf32>
      %39 = arith.subf %3, %38 : vector<16x128xf32>
      %40 = arith.subf %39, %37 : vector<16x128xf32>
      %41 = math.exp %37 : vector<16x128xf32>
      %cst_15 = arith.constant 5.000000e-01 : f32
      %42 = vector.broadcast %cst_15 : f32 to vector<16x128xf32>
      %43 = arith.cmpf ogt, %4, %42 : vector<16x128xf32>
      %cst_16 = arith.constant 1.000000e+00 : f32
      %44 = vector.broadcast %cst_16 : f32 to vector<16x128xf32>
      %45 = arith.subf %44, %41 : vector<16x128xf32>
      %46 = arith.select %43, %45, %41 : vector<16x128xi1>, vector<16x128xf32>
      %47 = arith.mulf %46, %46 : vector<16x128xf32>
      %48 = arith.mulf %47, %40 : vector<16x128xf32>
      %c0_17 = arith.constant 0 : index
      %c0_18 = arith.constant 0 : index
      %c0_19 = arith.constant 0 : index
      %49 = vector.load %arg5[%c0_17, %c0_18, %c0_19] : memref<4x8x128xf32, #tpu.memory_space<vmem>>, vector<1x8x128xf32>
      %50 = vector.shape_cast %49 : vector<1x8x128xf32> to vector<8x128xf32>
      %51 = vector.shape_cast %48 : vector<16x128xf32> to vector<2x8x128xf32>
      %cst_20 = arith.constant dense<0.000000e+00> : vector<8x128xf32>
      %52 = vector.multi_reduction <add>, %51, %cst_20 [0] : vector<2x8x128xf32> to vector<8x128xf32>
      %53 = arith.addf %50, %52 : vector<8x128xf32>
      %c0_21 = arith.constant 0 : index
      %c0_22 = arith.constant 0 : index
      %c0_23 = arith.constant 0 : index
      %54 = vector.load %arg5[%c0_21, %c0_22, %c0_23] : memref<4x8x128xf32, #tpu.memory_space<vmem>>, vector<1x8x128xf32>
      %55 = vector.shape_cast %54 : vector<1x8x128xf32> to vector<8x128xf32>
      %56 = vector.shape_cast %53 : vector<8x128xf32> to vector<1x8x128xf32>
      tpu.vector_store %arg5[%c0_21, %c0_22, %c0_23], %56 {strides = array<i32>} : memref<4x8x128xf32, #tpu.memory_space<vmem>>, vector<1x8x128xf32>,
      %c1 = arith.constant 1 : index
      %c0_24 = arith.constant 0 : index
      %c0_25 = arith.constant 0 : index
      %57 = vector.load %arg5[%c1, %c0_24, %c0_25] : memref<4x8x128xf32, #tpu.memory_space<vmem>>, vector<1x8x128xf32>
      %58 = vector.shape_cast %57 : vector<1x8x128xf32> to vector<8x128xf32>
      %59 = arith.mulf %41, %4 : vector<16x128xf32>
      %60 = vector.shape_cast %59 : vector<16x128xf32> to vector<2x8x128xf32>
      %cst_26 = arith.constant dense<0.000000e+00> : vector<8x128xf32>
      %61 = vector.multi_reduction <add>, %60, %cst_26 [0] : vector<2x8x128xf32> to vector<8x128xf32>
      %62 = arith.addf %58, %61 : vector<8x128xf32>
      %c1_27 = arith.constant 1 : index
      %c0_28 = arith.constant 0 : index
      %c0_29 = arith.constant 0 : index
      %63 = vector.load %arg5[%c1_27, %c0_28, %c0_29] : memref<4x8x128xf32, #tpu.memory_space<vmem>>, vector<1x8x128xf32>
      %64 = vector.shape_cast %63 : vector<1x8x128xf32> to vector<8x128xf32>
      %65 = vector.shape_cast %62 : vector<8x128xf32> to vector<1x8x128xf32>
      tpu.vector_store %arg5[%c1_27, %c0_28, %c0_29], %65 {strides = array<i32>} : memref<4x8x128xf32, #tpu.memory_space<vmem>>, vector<1x8x128xf32>,
      %c2 = arith.constant 2 : index
      %c0_30 = arith.constant 0 : index
      %c0_31 = arith.constant 0 : index
      %66 = vector.load %arg5[%c2, %c0_30, %c0_31] : memref<4x8x128xf32, #tpu.memory_space<vmem>>, vector<1x8x128xf32>
      %67 = vector.shape_cast %66 : vector<1x8x128xf32> to vector<8x128xf32>
      %68 = vector.shape_cast %41 : vector<16x128xf32> to vector<2x8x128xf32>
      %cst_32 = arith.constant dense<0.000000e+00> : vector<8x128xf32>
      %69 = vector.multi_reduction <add>, %68, %cst_32 [0] : vector<2x8x128xf32> to vector<8x128xf32>
      %70 = arith.addf %67, %69 : vector<8x128xf32>
      %c2_33 = arith.constant 2 : index
      %c0_34 = arith.constant 0 : index
      %c0_35 = arith.constant 0 : index
      %71 = vector.load %arg5[%c2_33, %c0_34, %c0_35] : memref<4x8x128xf32, #tpu.memory_space<vmem>>, vector<1x8x128xf32>
      %72 = vector.shape_cast %71 : vector<1x8x128xf32> to vector<8x128xf32>
      %73 = vector.shape_cast %70 : vector<8x128xf32> to vector<1x8x128xf32>
      tpu.vector_store %arg5[%c2_33, %c0_34, %c0_35], %73 {strides = array<i32>} : memref<4x8x128xf32, #tpu.memory_space<vmem>>, vector<1x8x128xf32>,
      %c3 = arith.constant 3 : index
      %c0_36 = arith.constant 0 : index
      %c0_37 = arith.constant 0 : index
      %74 = vector.load %arg5[%c3, %c0_36, %c0_37] : memref<4x8x128xf32, #tpu.memory_space<vmem>>, vector<1x8x128xf32>
      %75 = vector.shape_cast %74 : vector<1x8x128xf32> to vector<8x128xf32>
      %76 = vector.shape_cast %4 : vector<16x128xf32> to vector<2x8x128xf32>
      %cst_38 = arith.constant dense<0.000000e+00> : vector<8x128xf32>
      %77 = vector.multi_reduction <add>, %76, %cst_38 [0] : vector<2x8x128xf32> to vector<8x128xf32>
      %78 = arith.addf %75, %77 : vector<8x128xf32>
      %c3_39 = arith.constant 3 : index
      %c0_40 = arith.constant 0 : index
      %c0_41 = arith.constant 0 : index
      %79 = vector.load %arg5[%c3_39, %c0_40, %c0_41] : memref<4x8x128xf32, #tpu.memory_space<vmem>>, vector<1x8x128xf32>
      %80 = vector.shape_cast %79 : vector<1x8x128xf32> to vector<8x128xf32>
      %81 = vector.shape_cast %78 : vector<8x128xf32> to vector<1x8x128xf32>
      tpu.vector_store %arg5[%c3_39, %c0_40, %c0_41], %81 {strides = array<i32>} : memref<4x8x128xf32, #tpu.memory_space<vmem>>, vector<1x8x128xf32>,
    } else {
    }
    %c16_i32_7 = arith.constant 16 : i32
    %12 = arith.cmpi slt, %7, %c16_i32_7 : i32
    %c16_i32_8 = arith.constant 16 : i32
    %13 = arith.cmpi sgt, %8, %c16_i32_8 : i32
    %14 = arith.andi %12, %13 : i1
    %15 = arith.extui %14 : i1 to i32
    %c0_i32_9 = arith.constant 0 : i32
    %16 = arith.cmpi ne, %15, %c0_i32_9 : i32
    scf.if %16 {
      %20 = tpu.iota {dimensions = array<i32: 0>} : vector<16x128xi32>
      %21 = vector.broadcast %7 : i32 to vector<16x128xi32>
      %22 = arith.addi %21, %20 : vector<16x128xi32>
      %c16_i32_12 = arith.constant 16 : i32
      %23 = vector.broadcast %c16_i32_12 : i32 to vector<16x128xi32>
      %24 = arith.cmpi slt, %22, %23 : vector<16x128xi32>
      %cst = arith.constant 0.000000e+00 : f32
      %25 = vector.broadcast %cst : f32 to vector<16x128xf32>
      %26 = arith.select %24, %3, %25 : vector<16x128xi1>, vector<16x128xf32>
      %cst_13 = arith.constant 0.000000e+00 : f32
      %27 = vector.broadcast %cst_13 : f32 to vector<16x128xf32>
      %28 = arith.select %24, %4, %27 : vector<16x128xi1>, vector<16x128xf32>
      %cst_14 = arith.constant 0.000000e+00 : f32
      %29 = vector.broadcast %cst_14 : f32 to vector<16x128xf32>
      %30 = arith.subf %29, %26 : vector<16x128xf32>
      %cst_15 = arith.constant 0.000000e+00 : f32
      %31 = vector.broadcast %cst_15 : f32 to vector<16x128xf32>
      %32 = arith.maximumf %30, %31 : vector<16x128xf32>
      %33 = vector.broadcast %cst_15 : f32 to vector<16x128xf32>
      %34 = arith.subf %30, %33 : vector<16x128xf32>
      %35 = arith.cmpf one, %34, %34 : vector<16x128xf32>
      %36 = vector.broadcast %cst_15 : f32 to vector<16x128xf32>
      %37 = arith.addf %30, %36 : vector<16x128xf32>
      %38 = math.absf %34 : vector<16x128xf32>
      %cst_16 = arith.constant 0.000000e+00 : f32
      %39 = vector.broadcast %cst_16 : f32 to vector<16x128xf32>
      %40 = arith.subf %39, %38 : vector<16x128xf32>
      %41 = math.exp %40 : vector<16x128xf32>
      %42 = math.log1p %41 : vector<16x128xf32>
      %43 = arith.addf %32, %42 : vector<16x128xf32>
      %44 = arith.select %35, %37, %43 : vector<16x128xi1>, vector<16x128xf32>
      %cst_17 = arith.constant 0.000000e+00 : f32
      %45 = vector.broadcast %cst_17 : f32 to vector<16x128xf32>
      %46 = arith.subf %45, %44 : vector<16x128xf32>
      %47 = arith.mulf %26, %28 : vector<16x128xf32>
      %48 = arith.subf %26, %47 : vector<16x128xf32>
      %49 = arith.subf %48, %46 : vector<16x128xf32>
      %50 = math.exp %46 : vector<16x128xf32>
      %cst_18 = arith.constant 5.000000e-01 : f32
      %51 = vector.broadcast %cst_18 : f32 to vector<16x128xf32>
      %52 = arith.cmpf ogt, %28, %51 : vector<16x128xf32>
      %cst_19 = arith.constant 1.000000e+00 : f32
      %53 = vector.broadcast %cst_19 : f32 to vector<16x128xf32>
      %54 = arith.subf %53, %50 : vector<16x128xf32>
      %55 = arith.select %52, %54, %50 : vector<16x128xi1>, vector<16x128xf32>
      %56 = arith.mulf %55, %55 : vector<16x128xf32>
      %57 = arith.mulf %56, %49 : vector<16x128xf32>
      %58 = arith.extui %24 : vector<16x128xi1> to vector<16x128xi32>
      %59 = arith.sitofp %58 : vector<16x128xi32> to vector<16x128xf32>
      %60 = arith.mulf %57, %59 : vector<16x128xf32>
      %61 = arith.mulf %50, %59 : vector<16x128xf32>
      %c0_20 = arith.constant 0 : index
      %c0_21 = arith.constant 0 : index
      %c0_22 = arith.constant 0 : index
      %62 = vector.load %arg5[%c0_20, %c0_21, %c0_22] : memref<4x8x128xf32, #tpu.memory_space<vmem>>, vector<1x8x128xf32>
      %63 = vector.shape_cast %62 : vector<1x8x128xf32> to vector<8x128xf32>
      %64 = vector.shape_cast %60 : vector<16x128xf32> to vector<2x8x128xf32>
      %cst_23 = arith.constant dense<0.000000e+00> : vector<8x128xf32>
      %65 = vector.multi_reduction <add>, %64, %cst_23 [0] : vector<2x8x128xf32> to vector<8x128xf32>
      %66 = arith.addf %63, %65 : vector<8x128xf32>
      %c0_24 = arith.constant 0 : index
      %c0_25 = arith.constant 0 : index
      %c0_26 = arith.constant 0 : index
      %67 = vector.load %arg5[%c0_24, %c0_25, %c0_26] : memref<4x8x128xf32, #tpu.memory_space<vmem>>, vector<1x8x128xf32>
      %68 = vector.shape_cast %67 : vector<1x8x128xf32> to vector<8x128xf32>
      %69 = vector.shape_cast %66 : vector<8x128xf32> to vector<1x8x128xf32>
      tpu.vector_store %arg5[%c0_24, %c0_25, %c0_26], %69 {strides = array<i32>} : memref<4x8x128xf32, #tpu.memory_space<vmem>>, vector<1x8x128xf32>,
      %c1 = arith.constant 1 : index
      %c0_27 = arith.constant 0 : index
      %c0_28 = arith.constant 0 : index
      %70 = vector.load %arg5[%c1, %c0_27, %c0_28] : memref<4x8x128xf32, #tpu.memory_space<vmem>>, vector<1x8x128xf32>
      %71 = vector.shape_cast %70 : vector<1x8x128xf32> to vector<8x128xf32>
      %72 = arith.mulf %61, %28 : vector<16x128xf32>
      %73 = vector.shape_cast %72 : vector<16x128xf32> to vector<2x8x128xf32>
      %cst_29 = arith.constant dense<0.000000e+00> : vector<8x128xf32>
      %74 = vector.multi_reduction <add>, %73, %cst_29 [0] : vector<2x8x128xf32> to vector<8x128xf32>
      %75 = arith.addf %71, %74 : vector<8x128xf32>
      %c1_30 = arith.constant 1 : index
      %c0_31 = arith.constant 0 : index
      %c0_32 = arith.constant 0 : index
      %76 = vector.load %arg5[%c1_30, %c0_31, %c0_32] : memref<4x8x128xf32, #tpu.memory_space<vmem>>, vector<1x8x128xf32>
      %77 = vector.shape_cast %76 : vector<1x8x128xf32> to vector<8x128xf32>
      %78 = vector.shape_cast %75 : vector<8x128xf32> to vector<1x8x128xf32>
      tpu.vector_store %arg5[%c1_30, %c0_31, %c0_32], %78 {strides = array<i32>} : memref<4x8x128xf32, #tpu.memory_space<vmem>>, vector<1x8x128xf32>,
      %c2 = arith.constant 2 : index
      %c0_33 = arith.constant 0 : index
      %c0_34 = arith.constant 0 : index
      %79 = vector.load %arg5[%c2, %c0_33, %c0_34] : memref<4x8x128xf32, #tpu.memory_space<vmem>>, vector<1x8x128xf32>
      %80 = vector.shape_cast %79 : vector<1x8x128xf32> to vector<8x128xf32>
      %81 = vector.shape_cast %61 : vector<16x128xf32> to vector<2x8x128xf32>
      %cst_35 = arith.constant dense<0.000000e+00> : vector<8x128xf32>
      %82 = vector.multi_reduction <add>, %81, %cst_35 [0] : vector<2x8x128xf32> to vector<8x128xf32>
      %83 = arith.addf %80, %82 : vector<8x128xf32>
      %c2_36 = arith.constant 2 : index
      %c0_37 = arith.constant 0 : index
      %c0_38 = arith.constant 0 : index
      %84 = vector.load %arg5[%c2_36, %c0_37, %c0_38] : memref<4x8x128xf32, #tpu.memory_space<vmem>>, vector<1x8x128xf32>
      %85 = vector.shape_cast %84 : vector<1x8x128xf32> to vector<8x128xf32>
      %86 = vector.shape_cast %83 : vector<8x128xf32> to vector<1x8x128xf32>
      tpu.vector_store %arg5[%c2_36, %c0_37, %c0_38], %86 {strides = array<i32>} : memref<4x8x128xf32, #tpu.memory_space<vmem>>, vector<1x8x128xf32>,
      %c3 = arith.constant 3 : index
      %c0_39 = arith.constant 0 : index
      %c0_40 = arith.constant 0 : index
      %87 = vector.load %arg5[%c3, %c0_39, %c0_40] : memref<4x8x128xf32, #tpu.memory_space<vmem>>, vector<1x8x128xf32>
      %88 = vector.shape_cast %87 : vector<1x8x128xf32> to vector<8x128xf32>
      %89 = vector.shape_cast %28 : vector<16x128xf32> to vector<2x8x128xf32>
      %cst_41 = arith.constant dense<0.000000e+00> : vector<8x128xf32>
      %90 = vector.multi_reduction <add>, %89, %cst_41 [0] : vector<2x8x128xf32> to vector<8x128xf32>
      %91 = arith.addf %88, %90 : vector<8x128xf32>
      %c3_42 = arith.constant 3 : index
      %c0_43 = arith.constant 0 : index
      %c0_44 = arith.constant 0 : index
      %92 = vector.load %arg5[%c3_42, %c0_43, %c0_44] : memref<4x8x128xf32, #tpu.memory_space<vmem>>, vector<1x8x128xf32>
      %93 = vector.shape_cast %92 : vector<1x8x128xf32> to vector<8x128xf32>
      %94 = vector.shape_cast %91 : vector<8x128xf32> to vector<1x8x128xf32>
      tpu.vector_store %arg5[%c3_42, %c0_43, %c0_44], %94 {strides = array<i32>} : memref<4x8x128xf32, #tpu.memory_space<vmem>>, vector<1x8x128xf32>,
    } else {
    }
    %c0_i32_10 = arith.constant 0 : i32
    %17 = arith.cmpi eq, %arg1, %c0_i32_10 : i32
    %18 = arith.extui %17 : i1 to i32
    %c0_i32_11 = arith.constant 0 : i32
    %19 = arith.cmpi ne, %18, %c0_i32_11 : i32
    scf.if %19 {
      %c0_12 = arith.constant 0 : index
      %c0_13 = arith.constant 0 : index
      %c0_14 = arith.constant 0 : index
      %20 = vector.load %arg5[%c0_12, %c0_13, %c0_14] : memref<4x8x128xf32, #tpu.memory_space<vmem>>, vector<4x8x128xf32>
      %c0_15 = arith.constant 0 : index
      %c0_16 = arith.constant 0 : index
      %c0_17 = arith.constant 0 : index
      %21 = vector.load %arg4[%c0_15, %c0_16, %c0_17] : memref<4x8x128xf32, #tpu.memory_space<vmem>>, vector<4x8x128xf32>
      tpu.vector_store %arg4[%c0_15, %c0_16, %c0_17], %20 {strides = array<i32>} : memref<4x8x128xf32, #tpu.memory_space<vmem>>, vector<4x8x128xf32>,
    } else {
    }
    return
  }
  func.func @transform_0(%arg0: i32, %arg1: i32) -> (i32, i32) {
    %c1_i32 = arith.constant 1 : i32
    %0 = arith.muli %arg0, %c1_i32 : i32
    %1 = arith.addi %0, %arg1 : i32
    %c0_i32 = arith.constant 0 : i32
    %2 = arith.minsi %1, %c0_i32 : i32
    %c0_i32_0 = arith.constant 0 : i32
    %c0_i32_1 = arith.constant 0 : i32
    return %2, %c0_i32_0 : i32, i32
  }
  func.func @transform_1(%arg0: i32, %arg1: i32) -> (i32, i32) {
    %c1_i32 = arith.constant 1 : i32
    %0 = arith.muli %arg0, %c1_i32 : i32
    %1 = arith.addi %0, %arg1 : i32
    %c0_i32 = arith.constant 0 : i32
    %2 = arith.minsi %1, %c0_i32 : i32
    %c0_i32_0 = arith.constant 0 : i32
    %c0_i32_1 = arith.constant 0 : i32
    return %2, %c0_i32_0 : i32, i32
  }
  func.func @transform_2(%arg0: i32, %arg1: i32) -> (i32, i32, i32) {
    %c0_i32 = arith.constant 0 : i32
    %c0_i32_0 = arith.constant 0 : i32
    %c0_i32_1 = arith.constant 0 : i32
    return %arg0, %c0_i32, %c0_i32_0 : i32, i32, i32
  }
}

</mosaic_0001>

<llo_original>
// kernel: tpu_custom_call.1
$region0: #{tpu_custom_call.1}
  #allocation0 [shape = 'u32[]', space=smem, size = 0x4, offset = 0x4, fixed_abs, tag = 'smem constant byte address 0x4 - core index']
  #allocation1 [shape = 'u32[144,128]{1,0:T(1,128)}', space=vmem, size = 0x12000, scoped, tag = 'internal scratch']
  #allocation2 [shape = 'f32[4,8,128]{2,1,0:T(8,128)}', space=vmem, size = 0x4000, scoped, tag = 'scratch operand']
  %s0 = inlined_call_operand.hbm [shape: f32[16,128], index: 0, kind: input, shape index: {}]
  %s1 = inlined_call_operand.hbm [shape: f32[16,128], index: 1, kind: input, shape index: {}]
  %s2 = inlined_call_operand.hbm [shape: f32[4,8,128], index: 2, kind: output, shape index: {}]
  %s3 = sld [smem:[#allocation0]]
  $region42: #{tpu_custom_call.1} parent=0
    _
  %s5 = ssub.s32 1, %s3
  %s6 = scalar_select 0, %s5, %s3
  $region1: #{tpu_custom_call.1} parent=0
    #allocation3 [shape = 'u8[8192]{0}', space=vmem, size = 0x2000, scoped, tag = 'input window, operand 0, single buffered']
    #allocation4 [shape = 's32[1]{0}', space=sflag, size = 0x4, scoped, tag = 'scoped memory for tpu_custom_call.1']
    #allocation5 [shape = 's32[1]{0}', space=sflag, size = 0x4, scoped, tag = 'scoped memory for tpu_custom_call.1']
    #allocation6 [shape = 'u8[8192]{0}', space=vmem, size = 0x2000, scoped, tag = 'input window, operand 1, single buffered']
    #allocation7 [shape = 's32[1]{0}', space=sflag, size = 0x4, scoped, tag = 'scoped memory for tpu_custom_call.1']
    #allocation8 [shape = 'u8[16384]{0}', space=vmem, size = 0x4000, scoped, tag = 'output window, operand 0, single buffered']
    %7 = vsyncpa [#allocation4], 0
    %8 = vsyncpa [#allocation7], 0
    %9 = vsyncpa [#allocation5], 0
    // Predicated region
    $region2: #{tpu_custom_call.1} parent=1 // pred_check
      _
    $region3: #{tpu_custom_call.1} parent=1 // pred_check_branch
      %11 = sbr.rel (0) target = $region5
    $region4: #{tpu_custom_call.1} parent=1 // pred_region
      %s12 = sadd.s32 0, 0
      %p13 = scmp.lt.s32.totalorder %s12, 0
      %s14 = scalar_select %p13, %s12, 0
      %s15 = smul.u32 2, %s14
      %s17 = ssub.s32 256, 256
      %18 = vsyncadd [#allocation4], %s17
      %s19 = smul.addr %s15, 128
      %s20 = scalar_lea.hbm %s0, %s19
      %s21 = sshll.u32 [#allocation3], 4
      %s22 = int_to_ptr.vmem [resolvable:$true] %s21
      %27 = dma.hbm_to_vmem [thread:$0]  %s20, 256, %s22, [#allocation4], 128, 128, 8
    $region5: #{tpu_custom_call.1} parent=1 // pred_fallthru
      _
    // Predicated region
    $region6: #{tpu_custom_call.1} parent=1 // pred_check
      _
    $region7: #{tpu_custom_call.1} parent=1 // pred_check_branch
      %29 = sbr.rel (0) target = $region9
    $region8: #{tpu_custom_call.1} parent=1 // pred_region
      %s30 = sadd.s32 0, 0
      %p31 = scmp.lt.s32.totalorder %s30, 0
      %s32 = scalar_select %p31, %s30, 0
      %s33 = smul.u32 2, %s32
      %s35 = ssub.s32 256, 256
      %36 = vsyncadd [#allocation7], %s35
      %s37 = smul.addr %s33, 128
      %s38 = scalar_lea.hbm %s1, %s37
      %s39 = sshll.u32 [#allocation6], 4
      %s40 = int_to_ptr.vmem [resolvable:$true] %s39
      %45 = dma.hbm_to_vmem [thread:$0]  %s38, 256, %s40, [#allocation7], 128, 128, 8
    $region9: #{tpu_custom_call.1} parent=1 // pred_fallthru
      _
    // Predicated region
    $region10: #{tpu_custom_call.1} parent=1 // pred_check
      _
    $region11: #{tpu_custom_call.1} parent=1 // pred_check_branch
      %47 = sbr.rel (0) target = $region13
    $region12: #{tpu_custom_call.1} parent=1 // pred_region
      %48 = dma.done [#allocation4], 256
    $region13: #{tpu_custom_call.1} parent=1 // pred_fallthru
      _
    // Predicated region
    $region14: #{tpu_custom_call.1} parent=1 // pred_check
      _
    $region15: #{tpu_custom_call.1} parent=1 // pred_check_branch
      %50 = sbr.rel (0) target = $region17
    $region16: #{tpu_custom_call.1} parent=1 // pred_region
      %51 = dma.done [#allocation7], 256
    $region17: #{tpu_custom_call.1} parent=1 // pred_fallthru
      _
    %s52 = sadd.s32 0, 0
    %p53 = scmp.lt.s32.totalorder %s52, 0
    %s54 = scalar_select %p53, %s52, 0
    %s55 = smul.u32 2, %s54
    %s56 = sadd.s32 0, 0
    %p57 = scmp.lt.s32.totalorder %s56, 0
    %s58 = scalar_select %p57, %s56, 0
    %s59 = smul.u32 2, %s58
    %p60 = scmp.eq.s32.totalorder 0, 0
    // Predicated region
    $region18: #{tpu_custom_call.1} parent=1 // pred_check
      %p61 = pneg %p60
    $region19: #{tpu_custom_call.1} parent=1 // pred_check_branch
      %63 = sbr.rel (%p61) target = $region21
    $region20: #{tpu_custom_call.1} parent=1 // pred_region
      %64 = vst [vmem:[#allocation2] sm:$0xff] 0.0
      %65 = vst [vmem:[#allocation2 + $0x8] sm:$0xff] 0.0
      %66 = vst [vmem:[#allocation2 + $0x10] sm:$0xff] 0.0
      %67 = vst [vmem:[#allocation2 + $0x18] sm:$0xff] 0.0
    $region21: #{tpu_custom_call.1} parent=1 // pred_fallthru
      _
    %v68 = vld [vmem:[#allocation3] sm:$0xff]
    %v69 = vld [vmem:[#allocation3 + $0x8] sm:$0xff]
    %v70 = vld [vmem:[#allocation6] sm:$0xff]
    %v71 = vld [vmem:[#allocation6 + $0x8] sm:$0xff]
    %s72 = sadd.s32 0, 0
    %s73 = smul.u32 %s72, 16
    %s74 = sadd.s32 %s73, 16
    %p75 = scmp.le.s32.totalorder %s74, 16
    // Predicated region
    $region22: #{tpu_custom_call.1} parent=1 // pred_check
      %p76 = pneg %p75
    $region23: #{tpu_custom_call.1} parent=1 // pred_check_branch
      %78 = sbr.rel (%p76) target = $region25
    $region24: #{tpu_custom_call.1} parent=1 // pred_region
      %v79 = vsub.f32 0.0, %v68
      %v80 = vsub.f32 0.0, %v69
      %v81 = vmax.f32 %v79, 0.0
      %v82 = vmax.f32 %v80, 0.0
      %vm83 = vcmp.ne.f32.partialorder %v79, %v79
      %vm84 = vcmp.ne.f32.partialorder %v80, %v80
      %v85 = vadd.f32 %v79, 0.0
      %v86 = vadd.f32 %v80, 0.0
      %v87 = vand.u32 2147483647, %v79
      %v88 = vand.u32 2147483647, %v80
      %v89 = vsub.f32 0.0, %v87
      %v90 = vsub.f32 0.0, %v88
      %v91 = vmul.f32 %v89, 1.442695
      %v92 = vpow.pop %v91
      %v93 = vmul.f32 %v90, 1.442695
      %v94 = vpow.pop %v93
      %v95 = vadd.f32 %v92, 1.0
      %v96 = vlog2.pop %v95
      %v97 = vmul.f32 %v96, 0.6931472
      %v98 = vmul.f32 -0.5, %v92
      %v99 = vadd.f32 %v98, 1.0
      %v100 = vmul.f32 %v99, %v92
      %v101 = vand.u32 2147483647, %v92
      %vm102 = vcmp.lt.f32.partialorder %v101, 0.0004427343
      %v103 = vsel %vm102, %v100, %v97
      %v104 = vadd.f32 %v94, 1.0
      %v105 = vlog2.pop %v104
      %v106 = vmul.f32 %v105, 0.6931472
      %v107 = vmul.f32 -0.5, %v94
      %v108 = vadd.f32 %v107, 1.0
      %v109 = vmul.f32 %v108, %v94
      %v110 = vand.u32 2147483647, %v94
      %vm111 = vcmp.lt.f32.partialorder %v110, 0.0004427343
      %v112 = vsel %vm111, %v109, %v106
      %v113 = vadd.f32 %v81, %v103
      %v114 = vadd.f32 %v82, %v112
      %v115 = vsel %vm83, %v85, %v113
      %v116 = vsel %vm84, %v86, %v114
      %v117 = vsub.f32 0.0, %v115
      %v118 = vsub.f32 0.0, %v116
      %v119 = vmul.f32 %v68, %v70
      %v120 = vmul.f32 %v69, %v71
      %v121 = vsub.f32 %v68, %v119
      %v122 = vsub.f32 %v69, %v120
      %v123 = vsub.f32 %v121, %v117
      %v124 = vsub.f32 %v122, %v118
      %v125 = vmul.f32 %v117, 1.442695
      %v126 = vpow.pop %v125
      %v127 = vmul.f32 %v118, 1.442695
      %v128 = vpow.pop %v127
      %vm129 = vcmp.gt.f32.partialorder %v70, 0.5
      %vm130 = vcmp.gt.f32.partialorder %v71, 0.5
      %v131 = vsub.f32 1.0, %v126
      %v132 = vsub.f32 1.0, %v128
      %v133 = vsel %vm129, %v131, %v126
      %v134 = vsel %vm130, %v132, %v128
      %v135 = vmul.f32 %v133, %v133
      %v136 = vmul.f32 %v134, %v134
      %v137 = vmul.f32 %v135, %v123
      %v138 = vmul.f32 %v136, %v124
      %v139 = vld [vmem:[#allocation2] sm:$0xff]
      %v140 = vadd.f32 %v137, %v138
      %v141 = vadd.f32 %v139, %v140
      %142 = vst [vmem:[#allocation2] sm:$0xff] %v141
      %s143 = scalar_lea.vmem [#allocation2], 8
      %v144 = vld [vmem:[%s143] sm:$0xff]
      %v145 = vmul.f32 %v126, %v70
      %v146 = vmul.f32 %v128, %v71
      %v147 = vadd.f32 %v145, %v146
      %v148 = vadd.f32 %v144, %v147
      %149 = vst [vmem:[%s143] sm:$0xff] %v148
      %s150 = scalar_lea.vmem [#allocation2], 16
      %v151 = vld [vmem:[%s150] sm:$0xff]
      %v152 = vadd.f32 %v126, %v128
      %v153 = vadd.f32 %v151, %v152
      %154 = vst [vmem:[%s150] sm:$0xff] %v153
      %s155 = scalar_lea.vmem [#allocation2], 24
      %v156 = vld [vmem:[%s155] sm:$0xff]
      %v157 = vadd.f32 %v70, %v71
      %v158 = vadd.f32 %v156, %v157
      %159 = vst [vmem:[%s155] sm:$0xff] %v158
    $region25: #{tpu_custom_call.1} parent=1 // pred_fallthru
      _
    %p160 = scmp.lt.s32.totalorder %s73, 16
    %p161 = scmp.gt.s32.totalorder %s74, 16
    %p162 = pnand %p160, %p161
    %p163 = pneg %p162
    // Predicated region
    $region26: #{tpu_custom_call.1} parent=1 // pred_check
      _
    $region27: #{tpu_custom_call.1} parent=1 // pred_check_branch
      %165 = sbr.rel (%p162) target = $region29
    $region28: #{tpu_custom_call.1} parent=1 // pred_region
      %v166 = vlaneseq
      %v167 = vshrl.u32 %v166, 7
      %v168 = vadd.s32 %v167, 8
      %v169 = vstv %s73
      %v170 = vadd.s32 %v169, %v167
      %v171 = vadd.s32 %v169, %v168
      %vm172 = vcmp.lt.s32.totalorder %v170, 16
      %vm173 = vcmp.lt.s32.totalorder %v171, 16
      %v174 = vsel %vm172, %v68, 0.0
      %v175 = vsel %vm173, %v69, 0.0
      %v176 = vsel %vm172, %v70, 0.0
      %v177 = vsel %vm173, %v71, 0.0
      %v178 = vsub.f32 0.0, %v174
      %v179 = vsub.f32 0.0, %v175
      %v180 = vmax.f32 %v178, 0.0
      %v181 = vmax.f32 %v179, 0.0
      %vm182 = vcmp.ne.f32.partialorder %v178, %v178
      %vm183 = vcmp.ne.f32.partialorder %v179, %v179
      %v184 = vadd.f32 %v178, 0.0
      %v185 = vadd.f32 %v179, 0.0
      %v186 = vand.u32 2147483647, %v178
      %v187 = vand.u32 2147483647, %v179
      %v188 = vsub.f32 0.0, %v186
      %v189 = vsub.f32 0.0, %v187
      %v190 = vmul.f32 %v188, 1.442695
      %v191 = vpow.pop %v190
      %v192 = vmul.f32 %v189, 1.442695
      %v193 = vpow.pop %v192
      %v194 = vadd.f32 %v191, 1.0
      %v195 = vlog2.pop %v194
      %v196 = vmul.f32 %v195, 0.6931472
      %v197 = vmul.f32 -0.5, %v191
      %v198 = vadd.f32 %v197, 1.0
      %v199 = vmul.f32 %v198, %v191
      %v200 = vand.u32 2147483647, %v191
      %vm201 = vcmp.lt.f32.partialorder %v200, 0.0004427343
      %v202 = vsel %vm201, %v199, %v196
      %v203 = vadd.f32 %v193, 1.0
      %v204 = vlog2.pop %v203
      %v205 = vmul.f32 %v204, 0.6931472
      %v206 = vmul.f32 -0.5, %v193
      %v207 = vadd.f32 %v206, 1.0
      %v208 = vmul.f32 %v207, %v193
      %v209 = vand.u32 2147483647, %v193
      %vm210 = vcmp.lt.f32.partialorder %v209, 0.0004427343
      %v211 = vsel %vm210, %v208, %v205
      %v212 = vadd.f32 %v180, %v202
      %v213 = vadd.f32 %v181, %v211
      %v214 = vsel %vm182, %v184, %v212
      %v215 = vsel %vm183, %v185, %v213
      %v216 = vsub.f32 0.0, %v214
      %v217 = vsub.f32 0.0, %v215
      %v218 = vmul.f32 %v174, %v176
      %v219 = vmul.f32 %v175, %v177
      %v220 = vsub.f32 %v174, %v218
      %v221 = vsub.f32 %v175, %v219
      %v222 = vsub.f32 %v220, %v216
      %v223 = vsub.f32 %v221, %v217
      %v224 = vmul.f32 %v216, 1.442695
      %v225 = vpow.pop %v224
      %v226 = vmul.f32 %v217, 1.442695
      %v227 = vpow.pop %v226
      %vm228 = vcmp.gt.f32.partialorder %v176, 0.5
      %vm229 = vcmp.gt.f32.partialorder %v177, 0.5
      %v230 = vsub.f32 1.0, %v225
      %v231 = vsub.f32 1.0, %v227
      %v232 = vsel %vm228, %v230, %v225
      %v233 = vsel %vm229, %v231, %v227
      %v234 = vmul.f32 %v232, %v232
      %v235 = vmul.f32 %v233, %v233
      %v236 = vmul.f32 %v234, %v222
      %v237 = vmul.f32 %v235, %v223
      %v238 = vsel %vm172, 1, 0
      %v239 = vsel %vm173, 1, 0
      %v240 = vcvt.s32.f32 %v238
      %v241 = vcvt.s32.f32 %v239
      %v242 = vmul.f32 %v236, %v240
      %v243 = vmul.f32 %v237, %v241
      %v244 = vmul.f32 %v225, %v240
      %v245 = vmul.f32 %v227, %v241
      %v246 = vld [vmem:[#allocation2] sm:$0xff]
      %v247 = vadd.f32 %v242, %v243
      %v248 = vadd.f32 %v246, %v247
      %249 = vst [vmem:[#allocation2] sm:$0xff] %v248
      %s250 = scalar_lea.vmem [#allocation2], 8
      %v251 = vld [vmem:[%s250] sm:$0xff]
      %v252 = vmul.f32 %v244, %v176
      %v253 = vmul.f32 %v245, %v177
      %v254 = vadd.f32 %v252, %v253
      %v255 = vadd.f32 %v251, %v254
      %256 = vst [vmem:[%s250] sm:$0xff] %v255
      %s257 = scalar_lea.vmem [#allocation2], 16
      %v258 = vld [vmem:[%s257] sm:$0xff]
      %v259 = vadd.f32 %v244, %v245
      %v260 = vadd.f32 %v258, %v259
      %261 = vst [vmem:[%s257] sm:$0xff] %v260
      %s262 = scalar_lea.vmem [#allocation2], 24
      %v263 = vld [vmem:[%s262] sm:$0xff]
      %v264 = vadd.f32 %v176, %v177
      %v265 = vadd.f32 %v263, %v264
      %266 = vst [vmem:[%s262] sm:$0xff] %v265
    $region29: #{tpu_custom_call.1} parent=1 // pred_fallthru
      _
    // Predicated region
    $region30: #{tpu_custom_call.1} parent=1 // pred_check
      %p267 = pneg %p60
    $region31: #{tpu_custom_call.1} parent=1 // pred_check_branch
      %269 = sbr.rel (%p267) target = $region33
    $region32: #{tpu_custom_call.1} parent=1 // pred_region
      %v270 = vld [vmem:[#allocation2] sm:$0xff]
      %v271 = vld [vmem:[#allocation2 + $0x8] sm:$0xff]
      %v272 = vld [vmem:[#allocation2 + $0x10] sm:$0xff]
      %v273 = vld [vmem:[#allocation2 + $0x18] sm:$0xff]
      %274 = vst [vmem:[#allocation8] sm:$0xff] %v270
      %275 = vst [vmem:[#allocation8 + $0x8] sm:$0xff] %v271
      %276 = vst [vmem:[#allocation8 + $0x10] sm:$0xff] %v272
      %277 = vst [vmem:[#allocation8 + $0x18] sm:$0xff] %v273
    $region33: #{tpu_custom_call.1} parent=1 // pred_fallthru
      _
    // Predicated region
    $region34: #{tpu_custom_call.1} parent=1 // pred_check
      _
    $region35: #{tpu_custom_call.1} parent=1 // pred_check_branch
      %279 = sbr.rel (0) target = $region37
    $region36: #{tpu_custom_call.1} parent=1 // pred_region
      %s281 = ssub.s32 512, 512
      %282 = vsyncadd [#allocation5], %s281
      %s283 = sshll.u32 [#allocation8], 4
      %s284 = int_to_ptr.vmem [resolvable:$true] %s283
      %289 = dma.vmem_to_hbm [thread:$0]  %s284, 512, %s2, [#allocation5], 128, 128, 8
    $region37: #{tpu_custom_call.1} parent=1 // pred_fallthru
      _
    // Predicated region
    $region38: #{tpu_custom_call.1} parent=1 // pred_check
      _
    $region39: #{tpu_custom_call.1} parent=1 // pred_check_branch
      %291 = sbr.rel (0) target = $region41
    $region40: #{tpu_custom_call.1} parent=1 // pred_region
      %292 = dma.done [#allocation5], 512
    $region41: #{tpu_custom_call.1} parent=1 // pred_fallthru
      _
    %293 = vsyncpa [#allocation4], 1
    %294 = vsyncpa [#allocation7], 1
    %295 = vsyncpa [#allocation5], 1

</llo_original>
